<compile_context>
chip_gen: v7x
topology: tpu7x:2x2x1
jax: 0.10.0
libtpu: 0.0.40
codegen_flags: <defaults>
</compile_context>

<pallas_src>
import functools

import jax
import jax.numpy as jnp
from jax.experimental import pallas as pl
from jax.experimental.pallas import tpu as pltpu


def _round_up(n, m):
    return (n + m - 1) // m * m


def _mlp_kernel(x_ref,
                w1_ref, b1_ref,
                w2_ref, b2_ref,
                w3_ref, b3_ref,
                w4_ref, b4_ref,
                o_ref):
    # Layer 1: (TB,256)bf16 @ (256,128)bf16 -> f32, + bias, ReLU (f32 on VPU)
    h = jnp.dot(x_ref[...], w1_ref[...], preferred_element_type=jnp.float32)
    h = jnp.maximum(h + b1_ref[...], 0.0)
    # Layer 2: (TB,128) @ (128,64)
    h = jnp.dot(h.astype(w2_ref.dtype), w2_ref[...], preferred_element_type=jnp.float32)
    h = jnp.maximum(h + b2_ref[...], 0.0)
    # Layer 3: (TB,64) @ (64,32)
    h = jnp.dot(h.astype(w3_ref.dtype), w3_ref[...], preferred_element_type=jnp.float32)
    h = jnp.maximum(h + b3_ref[...], 0.0)
    # Layer 4 (lane-dense padded to 128 output columns; real logits live in cols 0:2)
    h = jnp.dot(h.astype(w4_ref.dtype), w4_ref[...], preferred_element_type=jnp.float32)
    o_ref[...] = (h + b4_ref[...]).astype(o_ref.dtype)


@functools.partial(jax.jit, static_argnames=("block_b",))
def old_tetris_net_forward(x, params, *, block_b=256):
    """x: (B, 216) float32; params: dict of (w1,b1,...,w4,b4). Returns (B, 2) float32."""
    B, K = x.shape
    assert K == 216, K

    # Batch tile: multiple of 8 sublanes; large batches use block_b (multiple of 128/256
    # is ideal for the MXU), tiny batches collapse to a single grid step.
    TB = min(block_b, _round_up(B, 8))
    Bp = _round_up(B, TB)

    # --- wrapper-side padding / dtype prep (layout plumbing, not compute) ---
    # x: pad batch B -> Bp, features 216 -> 256, cast to bf16 (halves DMA, MXU-native).
    xp = jnp.zeros((Bp, 256), jnp.bfloat16).at[:B, :216].set(x.astype(jnp.bfloat16))
    # w1: pad K 216 -> 256 with zeros (no effect on result).
    w1 = jnp.zeros((256, 128), jnp.bfloat16).at[:216, :].set(params["w1"].astype(jnp.bfloat16))
    w2 = params["w2"].astype(jnp.bfloat16)
    w3 = params["w3"].astype(jnp.bfloat16)
    # w4/b4: pad output 2 -> 128 columns so the kernel's stores are lane-dense.
    w4 = jnp.zeros((32, 128), jnp.bfloat16).at[:, :2].set(params["w4"].astype(jnp.bfloat16))
    b1 = params["b1"].astype(jnp.float32)
    b2 = params["b2"].astype(jnp.float32)
    b3 = params["b3"].astype(jnp.float32)
    b4 = jnp.zeros((1, 128), jnp.float32).at[:, :2].set(params["b4"].astype(jnp.float32))

    n_blocks = Bp // TB
    flops = 2 * Bp * (256 * 128 + 128 * 64 + 64 * 32 + 32 * 128)
    bytes_accessed = (
        Bp * 256 * 2                                             # x (bf16)
        + (256 * 128 + 128 * 64 + 64 * 32 + 32 * 128) * 2        # weights (bf16)
        + (128 + 64 + 32 + 128) * 4                              # biases (f32)
        + Bp * 128 * 4                                           # output (f32)
    )

    const = lambda i: (0, 0)  # weights/biases: DMA'd once, resident across grid steps
    out = pl.pallas_call(
        _mlp_kernel,
        out_shape=jax.ShapeDtypeStruct((Bp, 128), jnp.float32),
        grid=(n_blocks,),
        in_specs=[
            pl.BlockSpec((TB, 256), lambda i: (i, 0)),   # x tiles streamed over batch
            pl.BlockSpec((256, 128), const),             # w1
            pl.BlockSpec((1, 128), const),               # b1
            pl.BlockSpec((128, 64), const),              # w2
            pl.BlockSpec((1, 64), const),                # b2
            pl.BlockSpec((64, 32), const),               # w3
            pl.BlockSpec((1, 32), const),                # b3
            pl.BlockSpec((32, 128), const),              # w4 (padded to 128 cols)
            pl.BlockSpec((1, 128), const),               # b4 (padded to 128 cols)
        ],
        out_specs=pl.BlockSpec((TB, 128), lambda i: (i, 0)),
        compiler_params=pltpu.CompilerParams(
            dimension_semantics=("parallel",)),
        cost_estimate=pl.CostEstimate(
            flops=flops, transcendentals=0, bytes_accessed=bytes_accessed),
    )(xp, w1, b1, w2, b2, w3, b3, w4, b4)

    # Strip batch padding and the lane padding of the final layer.
    return out[:B, :2]


def init_params(key):
    """Deterministic synthetic init matching torch nn.Linear shapes.

    torch stores weight as (out, in); we store the transpose (in, out) for x @ W.
    Uses the same U(-1/sqrt(fan_in), 1/sqrt(fan_in)) convention as torch's default.
    """
    dims = [216, 128, 64, 32, 2]
    params = {}
    keys = jax.random.split(key, 2 * (len(dims) - 1))
    for i in range(len(dims) - 1):
        fan_in, fan_out = dims[i], dims[i + 1]
        bound = 1.0 / jnp.sqrt(jnp.float32(fan_in))
        w = jax.random.uniform(keys[2 * i], (fan_in, fan_out), jnp.float32,
                               minval=-bound, maxval=bound)
        b = jax.random.uniform(keys[2 * i + 1], (1, fan_out), jnp.float32,
                               minval=-bound, maxval=bound)
        params[f"w{i + 1}"] = w
        params[f"b{i + 1}"] = b
    return params


def _reference_f32(x, p):
    h = jnp.maximum(x @ p["w1"] + p["b1"], 0.0)
    h = jnp.maximum(h @ p["w2"] + p["b2"], 0.0)
    h = jnp.maximum(h @ p["w3"] + p["b3"], 0.0)
    return h @ p["w4"] + p["b4"]


def _reference_bf16(x, p):
    """Pure-JAX reference using the same bf16-operand / f32-accumulate recipe."""
    def lin(h, w, b):
        return jnp.dot(h.astype(jnp.bfloat16), w.astype(jnp.bfloat16),
                       preferred_element_type=jnp.float32) + b.astype(jnp.float32)
    h = jnp.maximum(lin(x, p["w1"], p["b1"]), 0.0)
    h = jnp.maximum(lin(h, p["w2"], p["b2"]), 0.0)
    h = jnp.maximum(lin(h, p["w3"], p["b3"]), 0.0)
    return lin(h, p["w4"], p["b4"])


if __name__ == "__main__":
    key = jax.random.PRNGKey(0)
    k_params, k_x = jax.random.split(key)
    params = init_params(k_params)

    B = 40  # small batch; not a multiple of the test tile size -> exercises batch padding
    x = jax.random.normal(k_x, (B, 216), jnp.float32)

    ref_bf16 = _reference_bf16(x, params)
    ref_f32 = _reference_f32(x, params)

    # 1) default tiling (single grid step at this small B)
    out = jax.block_until_ready(old_tetris_net_forward(x, params))
    assert out.shape == (B, 2), out.shape
    assert jnp.allclose(out, ref_bf16, atol=2e-3, rtol=2e-3), "mismatch vs bf16 reference"
    assert jnp.allclose(out, ref_f32, atol=1e-1, rtol=1e-1), "mismatch vs f32 reference"

    # 2) small tile size to exercise multi-step batch pipelining + tail padding
    out_tiled = jax.block_until_ready(old_tetris_net_forward(x, params, block_b=16))
    assert out_tiled.shape == (B, 2), out_tiled.shape
    assert jnp.allclose(out_tiled, ref_bf16, atol=2e-3, rtol=2e-3), "tiled mismatch vs bf16 reference"

    print("KERNEL_OK")
</pallas_src>

<mosaic_0001>
module attributes {stable_mosaic.version = 11 : i64} {
  func.func @_mlp_kernel(%arg0: i32, %arg1: memref<40x256xbf16, #tpu.memory_space<vmem>>, %arg2: memref<256x128xbf16, #tpu.memory_space<vmem>>, %arg3: memref<1x128xf32, #tpu.memory_space<vmem>>, %arg4: memref<128x64xbf16, #tpu.memory_space<vmem>>, %arg5: memref<1x64xf32, #tpu.memory_space<vmem>>, %arg6: memref<64x32xbf16, #tpu.memory_space<vmem>>, %arg7: memref<1x32xf32, #tpu.memory_space<vmem>>, %arg8: memref<32x128xbf16, #tpu.memory_space<vmem>>, %arg9: memref<1x128xf32, #tpu.memory_space<vmem>>, %arg10: memref<40x128xf32, #tpu.memory_space<vmem>>) attributes {dimension_semantics = [#tpu.dimension_semantics<parallel>], iteration_bounds = array<i64: 1>, scalar_prefetch = 0 : i64, scratch_operands = 0 : i64, tpu.core_type = #tpu.core_type<tc>, window_params = [{transform_indices = @transform_0, window_bounds = array<i64: 40, 256>}, {pipeline_mode = #tpu.pipeline_mode<synchronous>, transform_indices = @transform_1, window_bounds = array<i64: 256, 128>}, {pipeline_mode = #tpu.pipeline_mode<synchronous>, transform_indices = @transform_2, window_bounds = array<i64: 1, 128>}, {pipeline_mode = #tpu.pipeline_mode<synchronous>, transform_indices = @transform_3, window_bounds = array<i64: 128, 64>}, {pipeline_mode = #tpu.pipeline_mode<synchronous>, transform_indices = @transform_4, window_bounds = array<i64: 1, 64>}, {pipeline_mode = #tpu.pipeline_mode<synchronous>, transform_indices = @transform_5, window_bounds = array<i64: 64, 32>}, {pipeline_mode = #tpu.pipeline_mode<synchronous>, transform_indices = @transform_6, window_bounds = array<i64: 1, 32>}, {pipeline_mode = #tpu.pipeline_mode<synchronous>, transform_indices = @transform_7, window_bounds = array<i64: 32, 128>}, {pipeline_mode = #tpu.pipeline_mode<synchronous>, transform_indices = @transform_8, window_bounds = array<i64: 1, 128>}, {transform_indices = @transform_9, window_bounds = array<i64: 40, 128>}]} {
    %c0 = arith.constant 0 : index
    %c0_0 = arith.constant 0 : index
    %0 = vector.load %arg1[%c0, %c0_0] : memref<40x256xbf16, #tpu.memory_space<vmem>>, vector<40x256xbf16>
    %c0_1 = arith.constant 0 : index
    %c0_2 = arith.constant 0 : index
    %1 = vector.load %arg2[%c0_1, %c0_2] : memref<256x128xbf16, #tpu.memory_space<vmem>>, vector<256x128xbf16>
    %cst = arith.constant dense<0.000000e+00> : vector<40x128xf32>
    %2 = tpu.matmul %0, %1, %cst {dimension_numbers = #tpu.dot_dimension_numbers<[1], [0], [0], [1], [0, 0, 1, 1], [], []>} : vector<40x256xbf16>, vector<256x128xbf16>, vector<40x128xf32> -> vector<40x128xf32>
    %c0_3 = arith.constant 0 : index
    %c0_4 = arith.constant 0 : index
    %3 = vector.load %arg3[%c0_3, %c0_4] : memref<1x128xf32, #tpu.memory_space<vmem>>, vector<1x128xf32>
    %4 = vector.broadcast %3 : vector<1x128xf32> to vector<40x128xf32>
    %5 = arith.addf %2, %4 : vector<40x128xf32>
    %cst_5 = arith.constant 0.000000e+00 : f32
    %6 = vector.broadcast %cst_5 : f32 to vector<40x128xf32>
    %7 = arith.maximumf %5, %6 : vector<40x128xf32>
    %8 = arith.truncf %7 : vector<40x128xf32> to vector<40x128xbf16>
    %c0_6 = arith.constant 0 : index
    %c0_7 = arith.constant 0 : index
    %9 = vector.load %arg4[%c0_6, %c0_7] : memref<128x64xbf16, #tpu.memory_space<vmem>>, vector<128x64xbf16>
    %cst_8 = arith.constant dense<0.000000e+00> : vector<40x64xf32>
    %10 = tpu.matmul %8, %9, %cst_8 {dimension_numbers = #tpu.dot_dimension_numbers<[1], [0], [0], [1], [0, 0, 1, 1], [], []>} : vector<40x128xbf16>, vector<128x64xbf16>, vector<40x64xf32> -> vector<40x64xf32>
    %c0_9 = arith.constant 0 : index
    %c0_10 = arith.constant 0 : index
    %11 = vector.load %arg5[%c0_9, %c0_10] : memref<1x64xf32, #tpu.memory_space<vmem>>, vector<1x64xf32>
    %12 = vector.broadcast %11 : vector<1x64xf32> to vector<40x64xf32>
    %13 = arith.addf %10, %12 : vector<40x64xf32>
    %cst_11 = arith.constant 0.000000e+00 : f32
    %14 = vector.broadcast %cst_11 : f32 to vector<40x64xf32>
    %15 = arith.maximumf %13, %14 : vector<40x64xf32>
    %16 = arith.truncf %15 : vector<40x64xf32> to vector<40x64xbf16>
    %c0_12 = arith.constant 0 : index
    %c0_13 = arith.constant 0 : index
    %17 = vector.load %arg6[%c0_12, %c0_13] : memref<64x32xbf16, #tpu.memory_space<vmem>>, vector<64x32xbf16>
    %cst_14 = arith.constant dense<0.000000e+00> : vector<40x32xf32>
    %18 = tpu.matmul %16, %17, %cst_14 {dimension_numbers = #tpu.dot_dimension_numbers<[1], [0], [0], [1], [0, 0, 1, 1], [], []>} : vector<40x64xbf16>, vector<64x32xbf16>, vector<40x32xf32> -> vector<40x32xf32>
    %c0_15 = arith.constant 0 : index
    %c0_16 = arith.constant 0 : index
    %19 = vector.load %arg7[%c0_15, %c0_16] : memref<1x32xf32, #tpu.memory_space<vmem>>, vector<1x32xf32>
    %20 = vector.broadcast %19 : vector<1x32xf32> to vector<40x32xf32>
    %21 = arith.addf %18, %20 : vector<40x32xf32>
    %cst_17 = arith.constant 0.000000e+00 : f32
    %22 = vector.broadcast %cst_17 : f32 to vector<40x32xf32>
    %23 = arith.maximumf %21, %22 : vector<40x32xf32>
    %24 = arith.truncf %23 : vector<40x32xf32> to vector<40x32xbf16>
    %c0_18 = arith.constant 0 : index
    %c0_19 = arith.constant 0 : index
    %25 = vector.load %arg8[%c0_18, %c0_19] : memref<32x128xbf16, #tpu.memory_space<vmem>>, vector<32x128xbf16>
    %cst_20 = arith.constant dense<0.000000e+00> : vector<40x128xf32>
    %26 = tpu.matmul %24, %25, %cst_20 {dimension_numbers = #tpu.dot_dimension_numbers<[1], [0], [0], [1], [0, 0, 1, 1], [], []>} : vector<40x32xbf16>, vector<32x128xbf16>, vector<40x128xf32> -> vector<40x128xf32>
    %c0_21 = arith.constant 0 : index
    %c0_22 = arith.constant 0 : index
    %27 = vector.load %arg9[%c0_21, %c0_22] : memref<1x128xf32, #tpu.memory_space<vmem>>, vector<1x128xf32>
    %28 = vector.broadcast %27 : vector<1x128xf32> to vector<40x128xf32>
    %29 = arith.addf %26, %28 : vector<40x128xf32>
    %c0_23 = arith.constant 0 : index
    %c0_24 = arith.constant 0 : index
    %30 = vector.load %arg10[%c0_23, %c0_24] : memref<40x128xf32, #tpu.memory_space<vmem>>, vector<40x128xf32>
    tpu.vector_store %arg10[%c0_23, %c0_24], %29 {strides = array<i32>} : memref<40x128xf32, #tpu.memory_space<vmem>>, vector<40x128xf32>,
    return
  }
  func.func @transform_0(%arg0: i32) -> (i32, i32) {
    %c0_i32 = arith.constant 0 : i32
    %c0_i32_0 = arith.constant 0 : i32
    return %arg0, %c0_i32 : i32, i32
  }
  func.func @transform_1(%arg0: i32) -> (i32, i32) {
    %c0_i32 = arith.constant 0 : i32
    %c0_i32_0 = arith.constant 0 : i32
    %c0_i32_1 = arith.constant 0 : i32
    return %c0_i32, %c0_i32_0 : i32, i32
  }
  func.func @transform_2(%arg0: i32) -> (i32, i32) {
    %c0_i32 = arith.constant 0 : i32
    %c0_i32_0 = arith.constant 0 : i32
    %c0_i32_1 = arith.constant 0 : i32
    return %c0_i32, %c0_i32_0 : i32, i32
  }
  func.func @transform_3(%arg0: i32) -> (i32, i32) {
    %c0_i32 = arith.constant 0 : i32
    %c0_i32_0 = arith.constant 0 : i32
    %c0_i32_1 = arith.constant 0 : i32
    return %c0_i32, %c0_i32_0 : i32, i32
  }
  func.func @transform_4(%arg0: i32) -> (i32, i32) {
    %c0_i32 = arith.constant 0 : i32
    %c0_i32_0 = arith.constant 0 : i32
    %c0_i32_1 = arith.constant 0 : i32
    return %c0_i32, %c0_i32_0 : i32, i32
  }
  func.func @transform_5(%arg0: i32) -> (i32, i32) {
    %c0_i32 = arith.constant 0 : i32
    %c0_i32_0 = arith.constant 0 : i32
    %c0_i32_1 = arith.constant 0 : i32
    return %c0_i32, %c0_i32_0 : i32, i32
  }
  func.func @transform_6(%arg0: i32) -> (i32, i32) {
    %c0_i32 = arith.constant 0 : i32
    %c0_i32_0 = arith.constant 0 : i32
    %c0_i32_1 = arith.constant 0 : i32
    return %c0_i32, %c0_i32_0 : i32, i32
  }
  func.func @transform_7(%arg0: i32) -> (i32, i32) {
    %c0_i32 = arith.constant 0 : i32
    %c0_i32_0 = arith.constant 0 : i32
    %c0_i32_1 = arith.constant 0 : i32
    return %c0_i32, %c0_i32_0 : i32, i32
  }
  func.func @transform_8(%arg0: i32) -> (i32, i32) {
    %c0_i32 = arith.constant 0 : i32
    %c0_i32_0 = arith.constant 0 : i32
    %c0_i32_1 = arith.constant 0 : i32
    return %c0_i32, %c0_i32_0 : i32, i32
  }
  func.func @transform_9(%arg0: i32) -> (i32, i32) {
    %c0_i32 = arith.constant 0 : i32
    %c0_i32_0 = arith.constant 0 : i32
    return %arg0, %c0_i32 : i32, i32
  }
}

</mosaic_0001>

<llo_original>
// kernel: old_tetris_net_forward.1
$region0: #{old_tetris_net_forward.1}
  #allocation0 [shape = 'u32[]', space=smem, size = 0x4, offset = 0x4, fixed_abs, tag = 'smem constant byte address 0x4 - core index']
  #allocation1 [shape = 'u32[144,128]{1,0:T(1,128)}', space=vmem, size = 0x12000, scoped, tag = 'internal scratch']
  %s0 = inlined_call_operand.vmem [shape: bf16[40,256], index: 0, kind: input, shape index: {}]
  %s1 = inlined_call_operand.vmem [shape: bf16[256,128], index: 1, kind: input, shape index: {}]
  %s2 = inlined_call_operand.vmem [shape: f32[1,128], index: 2, kind: input, shape index: {}]
  %s3 = inlined_call_operand.vmem [shape: bf16[128,64], index: 3, kind: input, shape index: {}]
  %s4 = inlined_call_operand.vmem [shape: f32[1,64], index: 4, kind: input, shape index: {}]
  %s5 = inlined_call_operand.vmem [shape: bf16[64,32], index: 5, kind: input, shape index: {}]
  %s6 = inlined_call_operand.vmem [shape: f32[1,32], index: 6, kind: input, shape index: {}]
  %s7 = inlined_call_operand.vmem [shape: bf16[32,128], index: 7, kind: input, shape index: {}]
  %s8 = inlined_call_operand.vmem [shape: f32[1,128], index: 8, kind: input, shape index: {}]
  %s9 = inlined_call_operand.vmem [shape: f32[40,128], index: 9, kind: output, shape index: {}]
  %s10 = sld [smem:[#allocation0]]
  $region46: #{old_tetris_net_forward.1} parent=0
    _
  %s12 = ssub.s32 1, %s10
  %s13 = scalar_select 0, %s12, %s10
  // Predicated region
  $region2: #{old_tetris_net_forward.1} parent=0 // pred_check
    _
  $region3: #{old_tetris_net_forward.1} parent=0 // pred_check_branch
    %15 = sbr.rel (0) target = $region5
  $region4: #{old_tetris_net_forward.1} parent=0 // pred_region
    _
  $region5: #{old_tetris_net_forward.1} parent=0 // pred_fallthru
    _
  // Predicated region
  $region6: #{old_tetris_net_forward.1} parent=0 // pred_check
    _
  $region7: #{old_tetris_net_forward.1} parent=0 // pred_check_branch
    %17 = sbr.rel (0) target = $region9
  $region8: #{old_tetris_net_forward.1} parent=0 // pred_region
    _
  $region9: #{old_tetris_net_forward.1} parent=0 // pred_fallthru
    _
  // Predicated region
  $region10: #{old_tetris_net_forward.1} parent=0 // pred_check
    _
  $region11: #{old_tetris_net_forward.1} parent=0 // pred_check_branch
    %19 = sbr.rel (0) target = $region13
  $region12: #{old_tetris_net_forward.1} parent=0 // pred_region
    _
  $region13: #{old_tetris_net_forward.1} parent=0 // pred_fallthru
    _
  // Predicated region
  $region14: #{old_tetris_net_forward.1} parent=0 // pred_check
    _
  $region15: #{old_tetris_net_forward.1} parent=0 // pred_check_branch
    %21 = sbr.rel (0) target = $region17
  $region16: #{old_tetris_net_forward.1} parent=0 // pred_region
    _
  $region17: #{old_tetris_net_forward.1} parent=0 // pred_fallthru
    _
  // Predicated region
  $region18: #{old_tetris_net_forward.1} parent=0 // pred_check
    _
  $region19: #{old_tetris_net_forward.1} parent=0 // pred_check_branch
    %23 = sbr.rel (0) target = $region21
  $region20: #{old_tetris_net_forward.1} parent=0 // pred_region
    _
  $region21: #{old_tetris_net_forward.1} parent=0 // pred_fallthru
    _
  // Predicated region
  $region22: #{old_tetris_net_forward.1} parent=0 // pred_check
    _
  $region23: #{old_tetris_net_forward.1} parent=0 // pred_check_branch
    %25 = sbr.rel (0) target = $region25
  $region24: #{old_tetris_net_forward.1} parent=0 // pred_region
    _
  $region25: #{old_tetris_net_forward.1} parent=0 // pred_fallthru
    _
  // Predicated region
  $region26: #{old_tetris_net_forward.1} parent=0 // pred_check
    _
  $region27: #{old_tetris_net_forward.1} parent=0 // pred_check_branch
    %27 = sbr.rel (0) target = $region29
  $region28: #{old_tetris_net_forward.1} parent=0 // pred_region
    _
  $region29: #{old_tetris_net_forward.1} parent=0 // pred_fallthru
    _
  // Predicated region
  $region30: #{old_tetris_net_forward.1} parent=0 // pred_check
    _
  $region31: #{old_tetris_net_forward.1} parent=0 // pred_check_branch
    %29 = sbr.rel (0) target = $region33
  $region32: #{old_tetris_net_forward.1} parent=0 // pred_region
    _
  $region33: #{old_tetris_net_forward.1} parent=0 // pred_fallthru
    _
  // Predicated region
  $region34: #{old_tetris_net_forward.1} parent=0 // pred_check
    _
  $region35: #{old_tetris_net_forward.1} parent=0 // pred_check_branch
    %31 = sbr.rel (0) target = $region37
  $region36: #{old_tetris_net_forward.1} parent=0 // pred_region
    _
  $region37: #{old_tetris_net_forward.1} parent=0 // pred_fallthru
    _
  %v33 = vld [vmem:[%s0] sm:$0xff]
  %v34 = vld [vmem:[%s0 + $0x8] sm:$0xff]
  %v35 = vld [vmem:[%s0 + $0x10] sm:$0xff]
  %v36 = vld [vmem:[%s0 + $0x18] sm:$0xff]
  %v37 = vld [vmem:[%s0 + $0x20] sm:$0xff]
  %v38 = vld [vmem:[%s1] sm:$0xf]
  %v39 = vld [vmem:[%s1 + $0x4] sm:$0xf]
  %v40 = vld [vmem:[%s1 + $0x8] sm:$0xf]
  %v41 = vld [vmem:[%s1 + $0xc] sm:$0xf]
  %v42 = vld [vmem:[%s1 + $0x10] sm:$0xf]
  %v43 = vld [vmem:[%s1 + $0x14] sm:$0xf]
  %v44 = vld [vmem:[%s1 + $0x18] sm:$0xf]
  %v45 = vld [vmem:[%s1 + $0x1c] sm:$0xf]
  %v46 = vld [vmem:[%s1 + $0x20] sm:$0xf]
  %v47 = vld [vmem:[%s1 + $0x24] sm:$0xf]
  %v48 = vld [vmem:[%s1 + $0x28] sm:$0xf]
  %v49 = vld [vmem:[%s1 + $0x2c] sm:$0xf]
  %v50 = vld [vmem:[%s1 + $0x30] sm:$0xf]
  %v51 = vld [vmem:[%s1 + $0x34] sm:$0xf]
  %v52 = vld [vmem:[%s1 + $0x38] sm:$0xf]
  %v53 = vld [vmem:[%s1 + $0x3c] sm:$0xf]
  %v54 = vld [vmem:[%s1 + $0x40] sm:$0xf]
  %v55 = vld [vmem:[%s1 + $0x44] sm:$0xf]
  %v56 = vld [vmem:[%s1 + $0x48] sm:$0xf]
  %v57 = vld [vmem:[%s1 + $0x4c] sm:$0xf]
  %v58 = vld [vmem:[%s1 + $0x50] sm:$0xf]
  %v59 = vld [vmem:[%s1 + $0x54] sm:$0xf]
  %v60 = vld [vmem:[%s1 + $0x58] sm:$0xf]
  %v61 = vld [vmem:[%s1 + $0x5c] sm:$0xf]
  %v62 = vld [vmem:[%s1 + $0x60] sm:$0xf]
  %v63 = vld [vmem:[%s1 + $0x64] sm:$0xf]
  %v64 = vld [vmem:[%s1 + $0x68] sm:$0xf]
  %v65 = vld [vmem:[%s1 + $0x6c] sm:$0xf]
  %v66 = vld [vmem:[%s1 + $0x70] sm:$0xf]
  %v67 = vld [vmem:[%s1 + $0x74] sm:$0xf]
  %v68 = vld [vmem:[%s1 + $0x78] sm:$0xf]
  %v69 = vld [vmem:[%s1 + $0x7c] sm:$0xf]
  %v70 = vld [vmem:[%s2] sm:$0x1]
  %v72 = vlaneseq
  %v73 = vshrl.u32 %v72, 7
  %v74 = vsub.s32 0, %v73
  %v75 = vrot.slane %v70, %v74
  %v82 = vunpack.c.l.b16 %v33
  %v83 = vunpack.c.h.b16 %v33
  %v84 = vunpack.c.l.b16 %v34
  %v85 = vunpack.c.h.b16 %v34
  %v86 = vunpack.c.l.b16 %v35
  %v87 = vunpack.c.h.b16 %v35
  %v88 = vunpack.c.l.b16 %v36
  %v89 = vunpack.c.h.b16 %v36
  %v90 = vunpack.c.l.b16 %v37
  %v91 = vunpack.c.h.b16 %v37
  %v92 = vpack.c.b16 %v84, %v82
  %v93 = vpack.c.b16 %v85, %v83
  %v94 = vpack.c.b16 %v88, %v86
  %v95 = vpack.c.b16 %v89, %v87
  %v96 = vpack.c.b16 %v90, %v90
  %v97 = vpack.c.b16 %v91, %v91
  %v136 = vunpack.c.l.b16 %v38
  %v137 = vunpack.c.l.b16 %v39
  %v138 = vunpack.c.l.b16 %v40
  %v139 = vunpack.c.l.b16 %v41
  %v140 = vunpack.c.l.b16 %v42
  %v141 = vunpack.c.l.b16 %v43
  %v142 = vunpack.c.l.b16 %v44
  %v143 = vunpack.c.l.b16 %v45
  %v144 = vunpack.c.l.b16 %v46
  %v145 = vunpack.c.l.b16 %v47
  %v146 = vunpack.c.l.b16 %v48
  %v147 = vunpack.c.l.b16 %v49
  %v148 = vunpack.c.l.b16 %v50
  %v149 = vunpack.c.l.b16 %v51
  %v150 = vunpack.c.l.b16 %v52
  %v151 = vunpack.c.l.b16 %v53
  %v152 = vunpack.c.l.b16 %v54
  %v153 = vunpack.c.l.b16 %v55
  %v154 = vunpack.c.l.b16 %v56
  %v155 = vunpack.c.l.b16 %v57
  %v156 = vunpack.c.l.b16 %v58
  %v157 = vunpack.c.l.b16 %v59
  %v158 = vunpack.c.l.b16 %v60
  %v159 = vunpack.c.l.b16 %v61
  %v160 = vunpack.c.l.b16 %v62
  %v161 = vunpack.c.l.b16 %v63
  %v162 = vunpack.c.l.b16 %v64
  %v163 = vunpack.c.l.b16 %v65
  %v164 = vunpack.c.l.b16 %v66
  %v165 = vunpack.c.l.b16 %v67
  %v166 = vunpack.c.l.b16 %v68
  %v167 = vunpack.c.l.b16 %v69
  %v168 = vpack.c.b16 %v137, %v136
  %v169 = vpack.c.b16 %v139, %v138
  %v170 = vpack.c.b16 %v141, %v140
  %v171 = vpack.c.b16 %v143, %v142
  %v172 = vpack.c.b16 %v145, %v144
  %v173 = vpack.c.b16 %v147, %v146
  %v174 = vpack.c.b16 %v149, %v148
  %v175 = vpack.c.b16 %v151, %v150
  %v176 = vpack.c.b16 %v153, %v152
  %v177 = vpack.c.b16 %v155, %v154
  %v178 = vpack.c.b16 %v157, %v156
  %v179 = vpack.c.b16 %v159, %v158
  %v180 = vpack.c.b16 %v161, %v160
  %v181 = vpack.c.b16 %v163, %v162
  %v182 = vpack.c.b16 %v165, %v164
  %v183 = vpack.c.b16 %v167, %v166
  %200 = vmatprep.subr.bf16.mxu0 0
  %201 = vmatpush1.bf16.msra.mxu0 %v168
  %202 = vmatprep.subr.bf16.mxu0 0
  %203 = vmatpush1.bf16.msra.mxu0 %v169
  %204 = vmatprep.subr.bf16.mxu0 0
  %205 = vmatpush1.bf16.msra.mxu0 %v170
  %206 = vmatprep.subr.bf16.mxu0 0
  %207 = vmatpush1.bf16.msra.mxu0 %v171
  %208 = vmatprep.subr.bf16.mxu0 0
  %209 = vmatpush1.bf16.msra.mxu0 %v172
  %210 = vmatprep.subr.bf16.mxu0 0
  %211 = vmatpush1.bf16.msra.mxu0 %v173
  %212 = vmatprep.subr.bf16.mxu0 0
  %213 = vmatpush1.bf16.msra.mxu0 %v174
  %214 = vmatprep.subr.bf16.mxu0 0
  %215 = vmatpush1.bf16.msra.mxu0 %v175
  %216 = vmatprep.subr.bf16.mxu0 0
  %217 = vmatpush1.bf16.msra.mxu0 %v176
  %218 = vmatprep.subr.bf16.mxu0 0
  %219 = vmatpush1.bf16.msra.mxu0 %v177
  %220 = vmatprep.subr.bf16.mxu0 0
  %221 = vmatpush1.bf16.msra.mxu0 %v178
  %222 = vmatprep.subr.bf16.mxu0 0
  %223 = vmatpush1.bf16.msra.mxu0 %v179
  %224 = vmatprep.subr.bf16.mxu0 0
  %225 = vmatpush1.bf16.msra.mxu0 %v180
  %226 = vmatprep.subr.bf16.mxu0 0
  %227 = vmatpush1.bf16.msra.mxu0 %v181
  %228 = vmatprep.subr.bf16.mxu0 0
  %229 = vmatpush1.bf16.msra.mxu0 %v182
  %230 = vmatprep.subr.bf16.mxu0 0
  %231 = vmatpush1.bf16.msra.mxu0 %v183
  %232 = vmatprep.mubr.bf16.mxu0 %v93
  %233 = vmatmul.mubr.bf16.gmra.mrb[0].mxu0 %v92
  %v234 = vpop.f32.mrb[0].mxu0
  %v235 = vadd.f32 %v75, %v234
  %v236 = vpop.f32.mrb[0].mxu0
  %v237 = vpop.f32.mrb[0].mxu0
  %v238 = vadd.f32 %v75, %v237
  %v239 = vpop.f32.mrb[0].mxu0
  %240 = vmatprep.mubr.bf16.mxu0 %v95
  %241 = vmatmul.mubr.bf16.gmra.mrb[0].mxu0 %v94
  %v242 = vpop.f32.mrb[0].mxu0
  %v243 = vadd.f32 %v75, %v242
  %v244 = vpop.f32.mrb[0].mxu0
  %v245 = vpop.f32.mrb[0].mxu0
  %v246 = vadd.f32 %v75, %v245
  %v247 = vpop.f32.mrb[0].mxu0
  %248 = vmatprep.mubr.bf16.mxu0 %v97
  %249 = vmatmul.mubr.bf16.gmra.mrb[0].mxu0 %v96
  %v250 = vpop.f32.mrb[0].mxu0
  %v251 = vadd.f32 %v75, %v250
  %v252 = vpop.f32.mrb[0].mxu0
  %v253 = vpop.f32.mrb[0].mxu0
  %v254 = vpop.f32.mrb[0].mxu0
  %255 = vdwg.mxu0
  %v256 = vmax.f32 %v235, 0.0
  %v257 = vmax.f32 %v238, 0.0
  %v258 = vmax.f32 %v243, 0.0
  %v259 = vmax.f32 %v246, 0.0
  %v260 = vmax.f32 %v251, 0.0
  %v261 = vpack.c.bf16 %v257, %v256
  %v262 = vpack.c.bf16 %v259, %v258
  %v263 = vpack.c.bf16 %v260, %v260
  %v264 = vld [vmem:[%s3] sm:$0xf]
  %v265 = vld [vmem:[%s3 + $0x4] sm:$0xf]
  %v266 = vld [vmem:[%s3 + $0x8] sm:$0xf]
  %v267 = vld [vmem:[%s3 + $0xc] sm:$0xf]
  %v268 = vld [vmem:[%s3 + $0x10] sm:$0xf]
  %v269 = vld [vmem:[%s3 + $0x14] sm:$0xf]
  %v270 = vld [vmem:[%s3 + $0x18] sm:$0xf]
  %v271 = vld [vmem:[%s3 + $0x1c] sm:$0xf]
  %v272 = vld [vmem:[%s3 + $0x20] sm:$0xf]
  %v273 = vld [vmem:[%s3 + $0x24] sm:$0xf]
  %v274 = vld [vmem:[%s3 + $0x28] sm:$0xf]
  %v275 = vld [vmem:[%s3 + $0x2c] sm:$0xf]
  %v276 = vld [vmem:[%s3 + $0x30] sm:$0xf]
  %v277 = vld [vmem:[%s3 + $0x34] sm:$0xf]
  %v278 = vld [vmem:[%s3 + $0x38] sm:$0xf]
  %v279 = vld [vmem:[%s3 + $0x3c] sm:$0xf]
  %v280 = vld [vmem:[%s4] sm:$0x1]
  %v282 = vlaneseq
  %v283 = vshrl.u32 %v282, 7
  %v284 = vsub.s32 0, %v283
  %v285 = vrot.slane %v280, %v284
  %v303 = vunpack.c.l.b16 %v264
  %v304 = vunpack.c.l.b16 %v265
  %v305 = vunpack.c.l.b16 %v266
  %v306 = vunpack.c.l.b16 %v267
  %v307 = vunpack.c.l.b16 %v268
  %v308 = vunpack.c.l.b16 %v269
  %v309 = vunpack.c.l.b16 %v270
  %v310 = vunpack.c.l.b16 %v271
  %v311 = vunpack.c.l.b16 %v272
  %v312 = vunpack.c.l.b16 %v273
  %v313 = vunpack.c.l.b16 %v274
  %v314 = vunpack.c.l.b16 %v275
  %v315 = vunpack.c.l.b16 %v276
  %v316 = vunpack.c.l.b16 %v277
  %v317 = vunpack.c.l.b16 %v278
  %v318 = vunpack.c.l.b16 %v279
  %v319 = vpack.c.b16 %v304, %v303
  %v320 = vpack.c.b16 %v306, %v305
  %v321 = vpack.c.b16 %v308, %v307
  %v322 = vpack.c.b16 %v310, %v309
  %v323 = vpack.c.b16 %v312, %v311
  %v324 = vpack.c.b16 %v314, %v313
  %v325 = vpack.c.b16 %v316, %v315
  %v326 = vpack.c.b16 %v318, %v317
  %335 = vmatprep.subr.bf16.mxu0 0
  %336 = vmatpush1.bf16.msra.mxu0 %v319
  %337 = vmatprep.subr.bf16.mxu0 0
  %338 = vmatpush1.bf16.msra.mxu0 %v320
  %339 = vmatprep.subr.bf16.mxu0 0
  %340 = vmatpush1.bf16.msra.mxu0 %v321
  %341 = vmatprep.subr.bf16.mxu0 0
  %342 = vmatpush1.bf16.msra.mxu0 %v322
  %343 = vmatprep.subr.bf16.mxu0 0
  %344 = vmatpush1.bf16.msra.mxu0 %v323
  %345 = vmatprep.subr.bf16.mxu0 0
  %346 = vmatpush1.bf16.msra.mxu0 %v324
  %347 = vmatprep.subr.bf16.mxu0 0
  %348 = vmatpush1.bf16.msra.mxu0 %v325
  %349 = vmatprep.subr.bf16.mxu0 0
  %350 = vmatpush1.bf16.msra.mxu0 %v326
  %351 = vmatprep.subr.bf16.mxu0 0
  %352 = vmatpush1.bf16.msra.mxu0 0
  %353 = vmatprep.subr.bf16.mxu0 0
  %354 = vmatpush1.bf16.msra.mxu0 0
  %355 = vmatprep.subr.bf16.mxu0 0
  %356 = vmatpush1.bf16.msra.mxu0 0
  %357 = vmatprep.subr.bf16.mxu0 0
  %358 = vmatpush1.bf16.msra.mxu0 0
  %359 = vmatprep.subr.bf16.mxu0 0
  %360 = vmatpush1.bf16.msra.mxu0 0
  %361 = vmatprep.subr.bf16.mxu0 0
  %362 = vmatpush1.bf16.msra.mxu0 0
  %363 = vmatprep.subr.bf16.mxu0 0
  %364 = vmatpush1.bf16.msra.mxu0 0
  %365 = vmatprep.subr.bf16.mxu0 0
  %366 = vmatpush1.bf16.msra.mxu0 0
  %367 = vmatprep.mubr.bf16.mxu0 0
  %368 = vmatmul.mubr.bf16.gmra.mrb[0].mxu0 %v261
  %v369 = vpop.f32.mrb[0].mxu0
  %v370 = vadd.f32 %v285, %v369
  %v371 = vpop.f32.mrb[0].mxu0
  %v372 = vpop.f32.mrb[0].mxu0
  %v373 = vadd.f32 %v285, %v372
  %v374 = vpop.f32.mrb[0].mxu0
  %375 = vmatprep.mubr.bf16.mxu0 0
  %376 = vmatmul.mubr.bf16.gmra.mrb[0].mxu0 %v262
  %v377 = vpop.f32.mrb[0].mxu0
  %v378 = vadd.f32 %v285, %v377
  %v379 = vpop.f32.mrb[0].mxu0
  %v380 = vpop.f32.mrb[0].mxu0
  %v381 = vadd.f32 %v285, %v380
  %v382 = vpop.f32.mrb[0].mxu0
  %383 = vmatprep.mubr.bf16.mxu0 0
  %384 = vmatmul.mubr.bf16.gmra.mrb[0].mxu0 %v263
  %v385 = vpop.f32.mrb[0].mxu0
  %v386 = vadd.f32 %v285, %v385
  %v387 = vpop.f32.mrb[0].mxu0
  %v388 = vpop.f32.mrb[0].mxu0
  %v389 = vpop.f32.mrb[0].mxu0
  %390 = vdwg.mxu0
  %v391 = vmax.f32 %v370, 0.0
  %v392 = vmax.f32 %v373, 0.0
  %v393 = vmax.f32 %v378, 0.0
  %v394 = vmax.f32 %v381, 0.0
  %v395 = vmax.f32 %v386, 0.0
  %v396 = vpack.c.bf16 %v392, %v391
  %v397 = vpack.c.bf16 %v394, %v393
  %v398 = vpack.c.bf16 %v395, %v395
  %v399 = vld [vmem:[%s5] sm:$0xf]
  %v400 = vld [vmem:[%s5 + $0x4] sm:$0xf]
  %v401 = vld [vmem:[%s5 + $0x8] sm:$0xf]
  %v402 = vld [vmem:[%s5 + $0xc] sm:$0xf]
  %v403 = vld [vmem:[%s5 + $0x10] sm:$0xf]
  %v404 = vld [vmem:[%s5 + $0x14] sm:$0xf]
  %v405 = vld [vmem:[%s5 + $0x18] sm:$0xf]
  %v406 = vld [vmem:[%s5 + $0x1c] sm:$0xf]
  %v407 = vld [vmem:[%s6] sm:$0x1]
  %v409 = vlaneseq
  %v410 = vshrl.u32 %v409, 7
  %v411 = vsub.s32 0, %v410
  %v412 = vrot.slane %v407, %v411
  %v422 = vunpack.c.l.b16 %v399
  %v423 = vunpack.c.l.b16 %v400
  %v424 = vunpack.c.l.b16 %v401
  %v425 = vunpack.c.l.b16 %v402
  %v426 = vunpack.c.l.b16 %v403
  %v427 = vunpack.c.l.b16 %v404
  %v428 = vunpack.c.l.b16 %v405
  %v429 = vunpack.c.l.b16 %v406
  %v430 = vpack.c.b16 %v423, %v422
  %v431 = vpack.c.b16 %v425, %v424
  %v432 = vpack.c.b16 %v427, %v426
  %v433 = vpack.c.b16 %v429, %v428
  %vm438 = vcmask 523264
  %v440 = vsel %vm438, %v396, 0
  %v443 = vsel %vm438, %v397, 0
  %v446 = vsel %vm438, %v398, 0
  %448 = vmatprep.subr.bf16.mxu0 0
  %449 = vmatpush1.bf16.msra.mxu0 %v430
  %450 = vmatprep.subr.bf16.mxu0 0
  %451 = vmatpush1.bf16.msra.mxu0 %v431
  %452 = vmatprep.subr.bf16.mxu0 0
  %453 = vmatpush1.bf16.msra.mxu0 %v432
  %454 = vmatprep.subr.bf16.mxu0 0
  %455 = vmatpush1.bf16.msra.mxu0 %v433
  %456 = vmatprep.subr.bf16.mxu0 0
  %457 = vmatpush1.bf16.msra.mxu0 0
  %458 = vmatprep.subr.bf16.mxu0 0
  %459 = vmatpush1.bf16.msra.mxu0 0
  %460 = vmatprep.subr.bf16.mxu0 0
  %461 = vmatpush1.bf16.msra.mxu0 0
  %462 = vmatprep.subr.bf16.mxu0 0
  %463 = vmatpush1.bf16.msra.mxu0 0
  %464 = vmatprep.subr.bf16.mxu0 0
  %465 = vmatpush1.bf16.msra.mxu0 0
  %466 = vmatprep.subr.bf16.mxu0 0
  %467 = vmatpush1.bf16.msra.mxu0 0
  %468 = vmatprep.subr.bf16.mxu0 0
  %469 = vmatpush1.bf16.msra.mxu0 0
  %470 = vmatprep.subr.bf16.mxu0 0
  %471 = vmatpush1.bf16.msra.mxu0 0
  %472 = vmatprep.subr.bf16.mxu0 0
  %473 = vmatpush1.bf16.msra.mxu0 0
  %474 = vmatprep.subr.bf16.mxu0 0
  %475 = vmatpush1.bf16.msra.mxu0 0
  %476 = vmatprep.subr.bf16.mxu0 0
  %477 = vmatpush1.bf16.msra.mxu0 0
  %478 = vmatprep.subr.bf16.mxu0 0
  %479 = vmatpush1.bf16.msra.mxu0 0
  %480 = vmatprep.mubr.bf16.mxu0 0
  %481 = vmatmul.mubr.bf16.gmra.mrb[0].mxu0 %v440
  %v482 = vpop.f32.mrb[0].mxu0
  %v483 = vadd.f32 %v412, %v482
  %v484 = vpop.f32.mrb[0].mxu0
  %v485 = vpop.f32.mrb[0].mxu0
  %v486 = vadd.f32 %v412, %v485
  %v487 = vpop.f32.mrb[0].mxu0
  %488 = vmatprep.mubr.bf16.mxu0 0
  %489 = vmatmul.mubr.bf16.gmra.mrb[0].mxu0 %v443
  %v490 = vpop.f32.mrb[0].mxu0
  %v491 = vadd.f32 %v412, %v490
  %v492 = vpop.f32.mrb[0].mxu0
  %v493 = vpop.f32.mrb[0].mxu0
  %v494 = vadd.f32 %v412, %v493
  %v495 = vpop.f32.mrb[0].mxu0
  %496 = vmatprep.mubr.bf16.mxu0 0
  %497 = vmatmul.mubr.bf16.gmra.mrb[0].mxu0 %v446
  %v498 = vpop.f32.mrb[0].mxu0
  %v499 = vadd.f32 %v412, %v498
  %v500 = vpop.f32.mrb[0].mxu0
  %v501 = vpop.f32.mrb[0].mxu0
  %v502 = vpop.f32.mrb[0].mxu0
  %503 = vdwg.mxu0
  %v504 = vmax.f32 %v483, 0.0
  %v505 = vmax.f32 %v486, 0.0
  %v506 = vmax.f32 %v491, 0.0
  %v507 = vmax.f32 %v494, 0.0
  %v508 = vmax.f32 %v499, 0.0
  %v509 = vpack.c.bf16 %v505, %v504
  %v510 = vpack.c.bf16 %v507, %v506
  %v511 = vpack.c.bf16 %v508, %v508
  %v512 = vld [vmem:[%s7] sm:$0xf]
  %v513 = vld [vmem:[%s7 + $0x4] sm:$0xf]
  %v514 = vld [vmem:[%s7 + $0x8] sm:$0xf]
  %v515 = vld [vmem:[%s7 + $0xc] sm:$0xf]
  %v516 = vld [vmem:[%s8] sm:$0x1]
  %v518 = vlaneseq
  %v519 = vshrl.u32 %v518, 7
  %v520 = vsub.s32 0, %v519
  %v521 = vrot.slane %v516, %v520
  %v527 = vunpack.c.l.b16 %v512
  %v528 = vunpack.c.l.b16 %v513
  %v529 = vunpack.c.l.b16 %v514
  %v530 = vunpack.c.l.b16 %v515
  %v531 = vpack.c.b16 %v528, %v527
  %v532 = vpack.c.b16 %v530, %v529
  %vm535 = vcmask 261120
  %v537 = vsel %vm535, %v509, 0
  %v540 = vsel %vm535, %v510, 0
  %v543 = vsel %vm535, %v511, 0
  %545 = vmatprep.subr.bf16.mxu0 0
  %546 = vmatpush1.bf16.msra.mxu0 %v531
  %547 = vmatprep.subr.bf16.mxu0 0
  %548 = vmatpush1.bf16.msra.mxu0 %v532
  %549 = vmatprep.subr.bf16.mxu0 0
  %550 = vmatpush1.bf16.msra.mxu0 0
  %551 = vmatprep.subr.bf16.mxu0 0
  %552 = vmatpush1.bf16.msra.mxu0 0
  %553 = vmatprep.subr.bf16.mxu0 0
  %554 = vmatpush1.bf16.msra.mxu0 0
  %555 = vmatprep.subr.bf16.mxu0 0
  %556 = vmatpush1.bf16.msra.mxu0 0
  %557 = vmatprep.subr.bf16.mxu0 0
  %558 = vmatpush1.bf16.msra.mxu0 0
  %559 = vmatprep.subr.bf16.mxu0 0
  %560 = vmatpush1.bf16.msra.mxu0 0
  %561 = vmatprep.subr.bf16.mxu0 0
  %562 = vmatpush1.bf16.msra.mxu0 0
  %563 = vmatprep.subr.bf16.mxu0 0
  %564 = vmatpush1.bf16.msra.mxu0 0
  %565 = vmatprep.subr.bf16.mxu0 0
  %566 = vmatpush1.bf16.msra.mxu0 0
  %567 = vmatprep.subr.bf16.mxu0 0
  %568 = vmatpush1.bf16.msra.mxu0 0
  %569 = vmatprep.subr.bf16.mxu0 0
  %570 = vmatpush1.bf16.msra.mxu0 0
  %571 = vmatprep.subr.bf16.mxu0 0
  %572 = vmatpush1.bf16.msra.mxu0 0
  %573 = vmatprep.subr.bf16.mxu0 0
  %574 = vmatpush1.bf16.msra.mxu0 0
  %575 = vmatprep.subr.bf16.mxu0 0
  %576 = vmatpush1.bf16.msra.mxu0 0
  %577 = vmatprep.mubr.bf16.mxu0 0
  %578 = vmatmul.mubr.bf16.gmra.mrb[0].mxu0 %v537
  %v579 = vpop.f32.mrb[0].mxu0
  %v580 = vadd.f32 %v521, %v579
  %v581 = vpop.f32.mrb[0].mxu0
  %v582 = vpop.f32.mrb[0].mxu0
  %v583 = vadd.f32 %v521, %v582
  %v584 = vpop.f32.mrb[0].mxu0
  %585 = vmatprep.mubr.bf16.mxu0 0
  %586 = vmatmul.mubr.bf16.gmra.mrb[0].mxu0 %v540
  %v587 = vpop.f32.mrb[0].mxu0
  %v588 = vadd.f32 %v521, %v587
  %v589 = vpop.f32.mrb[0].mxu0
  %v590 = vpop.f32.mrb[0].mxu0
  %v591 = vadd.f32 %v521, %v590
  %v592 = vpop.f32.mrb[0].mxu0
  %593 = vmatprep.mubr.bf16.mxu0 0
  %594 = vmatmul.mubr.bf16.gmra.mrb[0].mxu0 %v543
  %v595 = vpop.f32.mrb[0].mxu0
  %v596 = vadd.f32 %v521, %v595
  %v597 = vpop.f32.mrb[0].mxu0
  %v598 = vpop.f32.mrb[0].mxu0
  %v599 = vpop.f32.mrb[0].mxu0
  %600 = vdwg.mxu0
  %601 = vst [vmem:[%s9] sm:$0xff] %v580
  %602 = vst [vmem:[%s9 + $0x8] sm:$0xff] %v583
  %603 = vst [vmem:[%s9 + $0x10] sm:$0xff] %v588
  %604 = vst [vmem:[%s9 + $0x18] sm:$0xff] %v591
  %605 = vst [vmem:[%s9 + $0x20] sm:$0xff] %v596
  // Predicated region
  $region38: #{old_tetris_net_forward.1} parent=0 // pred_check
    _
  $region39: #{old_tetris_net_forward.1} parent=0 // pred_check_branch
    %607 = sbr.rel (0) target = $region41
  $region40: #{old_tetris_net_forward.1} parent=0 // pred_region
    _
  $region41: #{old_tetris_net_forward.1} parent=0 // pred_fallthru
    _
  // Predicated region
  $region42: #{old_tetris_net_forward.1} parent=0 // pred_check
    _
  $region43: #{old_tetris_net_forward.1} parent=0 // pred_check_branch
    %609 = sbr.rel (0) target = $region45
  $region44: #{old_tetris_net_forward.1} parent=0 // pred_region
    _
  $region45: #{old_tetris_net_forward.1} parent=0 // pred_fallthru
    _

</llo_original>
